<compile_context>
chip_gen: v5e
topology: v5e:2x2
jax: 0.10.0
libtpu: 0.0.40
codegen_flags: <defaults>
</compile_context>

<pallas_src>
import functools
import math

import jax
import jax.numpy as jnp
from jax import lax
from jax.experimental import pallas as pl
from jax.experimental.pallas import tpu as pltpu


def _round_up(x, m):
    return ((x + m - 1) // m) * m


def _vmem_budget_bytes():
    """Generation-aware VMEM budget for blocks + scratch + temporaries."""
    try:
        cap = int(pltpu.get_tpu_info().vmem_capacity_bytes)
    except Exception:
        cap = 64 * 1024 * 1024          # conservative (v7x-sized) fallback
    if cap >= 100 * 1024 * 1024:        # v5e / v6e: 128 MiB physical VMEM
        return 64 * 1024 * 1024
    return 24 * 1024 * 1024             # v7x: 64 MiB physical VMEM


def _focal_loss_kernel(alpha_ref, logit_ref, target_ref, out_ref, acc_ref, *,
                       gamma, smooth, num_class, tile_rows, s_true, inv_count):
    i = pl.program_id(0)   # batch
    j = pl.program_id(1)   # location tile

    @pl.when(jnp.logical_and(i == 0, j == 0))
    def _init():
        acc_ref[...] = jnp.zeros_like(acc_ref)

    tgt = target_ref[...].astype(jnp.int32)                 # (R, 128)

    # Validity mask: covers both the pad-to-128 tail and a partial edge tile,
    # so no host-side payload padding / target==C trick is needed.
    row = lax.broadcasted_iota(jnp.int32, (tile_rows, 128), 0)
    lane = lax.broadcasted_iota(jnp.int32, (tile_rows, 128), 1)
    loc = (j * tile_rows + row) * 128 + lane
    valid = loc < s_true

    # Stable softmax pieces over the (tiny, static) class axis, unrolled.
    m = logit_ref[0].astype(jnp.float32)                    # (R, 128)
    for c in range(1, num_class):
        m = jnp.maximum(m, logit_ref[c].astype(jnp.float32))

    # One pass over C: denominator + select of exp(logit[target]-m) and
    # alpha[target] (no materialized one-hot, no XLU reductions per step).
    s = jnp.zeros_like(m)
    e_t = jnp.zeros_like(m)
    a_t = jnp.zeros_like(m)
    for c in range(num_class):
        e = jnp.exp(logit_ref[c].astype(jnp.float32) - m)
        s = s + e
        sel = tgt == c
        e_t = jnp.where(sel, e, e_t)
        a_t = jnp.where(sel, alpha_ref[c], a_t)

    # p_t = softmax(logit)[target] + smooth ; logpt = log(p_t)  (matches torch)
    p_t = e_t / s + smooth
    logpt = jnp.log(p_t)

    base = 1.0 - p_t
    g = int(gamma)
    if float(gamma) == float(g) and 0 <= g <= 8:
        # integer gamma -> multiply chain (no EUP pow, no NaN for base < 0)
        w = jnp.ones_like(base) if g == 0 else base
        for _ in range(g - 1):
            w = w * base
    else:
        # non-integer gamma: clamp tiny negative base (p_t ~ 1) to avoid NaN
        w = jnp.power(jnp.maximum(base, 0.0), gamma)

    # Sign folded into finalize; invalid (padded / OOB-edge) lanes contribute 0.
    acc_ref[...] += jnp.where(valid, a_t * w * logpt, 0.0)

    @pl.when(jnp.logical_and(i == pl.num_programs(0) - 1,
                             j == pl.num_programs(1) - 1))
    def _finalize():
        out_ref[0, 0] = -jnp.sum(acc_ref[...]) * inv_count  # reduction='mean'


def multi_focal_loss(logit, target, alpha, gamma=2.0, smooth=1e-4):
    """Pallas implementation of MultiFocalLoss.forward with reduction='mean'."""
    C = logit.shape[1]
    if logit.ndim > 2:
        N = logit.shape[0]
        S = int(math.prod(logit.shape[2:]))
        logit3d = logit.reshape(N, C, S)            # contiguous collapse: free
        target2d = target.reshape(N, S)
    else:
        # TODO(synk): the class-minor (M, C) path still pays one host-side HBM
        # transpose; a lane-axis-gather kernel variant would remove it.
        N, S = 1, logit.shape[0]
        logit3d = logit.T.reshape(1, C, S)
        target2d = target.reshape(1, S)

    if (not jnp.issubdtype(target2d.dtype, jnp.integer)
            or jnp.dtype(target2d.dtype).itemsize > 4):
        target2d = target2d.astype(jnp.int32)

    total = N * S                                   # true divisor for the mean

    # Pad only to the 128-lane boundary (needed for the free 4D reshape);
    # padded values are irrelevant because the kernel masks loc < S.
    s_pad = _round_up(S, 128)
    if s_pad != S:
        logit3d = jnp.pad(logit3d, ((0, 0), (0, 0), (0, s_pad - S)))
        target2d = jnp.pad(target2d, ((0, 0), (0, s_pad - S)))
    rows_total = s_pad // 128

    logit4d = logit3d.reshape(N, C, rows_total, 128)
    target3d = target2d.reshape(N, rows_total, 128)
    alpha1d = jnp.asarray(alpha, jnp.float32).reshape(C)

    # ---- VMEM-budget-driven, generation-aware tile sizing -------------------
    logit_is = jnp.dtype(logit4d.dtype).itemsize
    tgt_is = jnp.dtype(target3d.dtype).itemsize
    sub = {4: 8, 2: 16, 1: 32}                      # sublane multiple per dtype
    row_align = max(sub.get(logit_is, 8), sub.get(tgt_is, 8))

    budget = _vmem_budget_bytes()
    # per (1,128) row: double-buffered logit+target blocks, the f32 accumulator
    # scratch and ~8 tile-sized f32 temporaries the compiler keeps live.
    per_row = 128 * (2 * (C * logit_is + tgt_is) + 4 + 8 * 4)
    tile_rows = int(budget // per_row)
    tile_rows = max(row_align, min(tile_rows, 2048))
    if tile_rows >= rows_total:
        tile_rows, num_tiles = rows_total, 1        # block == full dim (legal)
    else:
        tile_rows = (tile_rows // row_align) * row_align
        num_tiles = -(-rows_total // tile_rows)     # partial edge tile is masked

    kernel = functools.partial(
        _focal_loss_kernel, gamma=float(gamma), smooth=float(smooth),
        num_class=C, tile_rows=tile_rows, s_true=S,
        inv_count=1.0 / float(total))

    n_elem = N * s_pad
    cost = pl.CostEstimate(
        flops=int(n_elem * (6 * C + 14)),
        transcendentals=int(n_elem * (C + 2)),
        bytes_accessed=int(logit4d.size * logit_is + target3d.size * tgt_is
                           + C * 4 + 4),
    )

    # TODO(synk): on v7x, split the reduction across the 2 TensorCores
    # (per-core partial sums + per-core accumulators, combined in JAX).
    out = pl.pallas_call(
        kernel,
        out_shape=jax.ShapeDtypeStruct((1, 1), jnp.float32),
        grid=(N, num_tiles),
        in_specs=[
            pl.BlockSpec(memory_space=pltpu.MemorySpace.SMEM),        # alpha (C,)
            pl.BlockSpec((None, C, tile_rows, 128),
                         lambda i, j: (i, 0, j, 0)),                  # logits
            pl.BlockSpec((None, tile_rows, 128),
                         lambda i, j: (i, j, 0)),                     # targets
        ],
        out_specs=pl.BlockSpec(memory_space=pltpu.MemorySpace.SMEM),  # scalar
        scratch_shapes=[pltpu.VMEM((tile_rows, 128), jnp.float32)],   # partials
        compiler_params=pltpu.CompilerParams(
            dimension_semantics=("arbitrary", "arbitrary"),
            vmem_limit_bytes=int(budget)),
        cost_estimate=cost,
    )(alpha1d, logit4d, target3d)
    return out[0, 0]


def _reference_loss(logit, target, alpha, gamma=2.0, smooth=1e-4):
    """Plain-JAX transcription of the PyTorch forward (for verification)."""
    C = logit.shape[1]
    prob = jax.nn.softmax(logit.astype(jnp.float32), axis=1)
    if prob.ndim > 2:
        prob = jnp.moveaxis(prob, 1, -1).reshape(-1, C)
    t = target.reshape(-1).astype(jnp.int32)
    pt = prob[jnp.arange(t.shape[0]), t] + smooth
    logpt = jnp.log(pt)
    aw = jnp.asarray(alpha, jnp.float32)[t]
    loss = -aw * jnp.power(1.0 - pt, gamma) * logpt
    return loss.mean()


if __name__ == "__main__":
    num_class = 4
    gamma = 2.0

    # alpha=None branch of the module: ones(num_class) - 0.5
    alpha = jnp.ones((num_class,), jnp.float32) - 0.5

    key = jax.random.PRNGKey(0)
    k1, k2, k3, k4 = jax.random.split(key, 4)

    # NCHW segmentation-style input: logit (N, C, H, W), target (N, H, W)
    logit_a = jax.random.normal(k1, (2, num_class, 16, 16), dtype=jnp.float32)
    target_a = jax.random.randint(k2, (2, 16, 16), 0, num_class, dtype=jnp.int32)
    loss_a = jax.block_until_ready(
        multi_focal_loss(logit_a, target_a, alpha, gamma=gamma))
    ref_a = jax.block_until_ready(
        _reference_loss(logit_a, target_a, alpha, gamma=gamma))
    assert jnp.allclose(loss_a, ref_a, rtol=2e-5, atol=2e-6), (loss_a, ref_a)

    # 2D (M, C) input with M not a multiple of 128 -> exercises the masked tail
    logit_b = jax.random.normal(k3, (200, num_class), dtype=jnp.float32)
    target_b = jax.random.randint(k4, (200,), 0, num_class, dtype=jnp.int32)
    loss_b = jax.block_until_ready(
        multi_focal_loss(logit_b, target_b, alpha, gamma=gamma))
    ref_b = jax.block_until_ready(
        _reference_loss(logit_b, target_b, alpha, gamma=gamma))
    assert jnp.allclose(loss_b, ref_b, rtol=2e-5, atol=2e-6), (loss_b, ref_b)

    print("KERNEL_OK")
</pallas_src>

<mosaic_0001>
module attributes {stable_mosaic.version = 11 : i64} {
  func.func @_focal_loss_kernel(%arg0: i32, %arg1: i32, %arg2: memref<4xf32, #tpu.memory_space<smem>>, %arg3: memref<1x4x2x128xf32, #tpu.memory_space<vmem>>, %arg4: memref<1x2x128xi32, #tpu.memory_space<vmem>>, %arg5: memref<1x1xf32, #tpu.memory_space<smem>>, %arg6: memref<2x128xf32, #tpu.memory_space<vmem>>) attributes {dimension_semantics = [#tpu.dimension_semantics<arbitrary>, #tpu.dimension_semantics<arbitrary>], iteration_bounds = array<i64: 2, 1>, scalar_prefetch = 0 : i64, scratch_operands = 1 : i64, tpu.core_type = #tpu.core_type<tc>, window_params = [{transform_indices = @transform_0, window_bounds = array<i64: 4>}, {transform_indices = @transform_1, window_bounds = array<i64: 1, 4, 2, 128>}, {transform_indices = @transform_2, window_bounds = array<i64: 1, 2, 128>}, {transform_indices = @transform_3, window_bounds = array<i64: 1, 1>}]} {
    %c0_i32 = arith.constant 0 : i32
    %0 = arith.cmpi eq, %arg0, %c0_i32 : i32
    %c0_i32_0 = arith.constant 0 : i32
    %1 = arith.cmpi eq, %arg1, %c0_i32_0 : i32
    %2 = arith.andi %0, %1 : i1
    %3 = arith.extui %2 : i1 to i32
    %c0_i32_1 = arith.constant 0 : i32
    %4 = arith.cmpi ne, %3, %c0_i32_1 : i32
    scf.if %4 {
      %cst_51 = arith.constant 0.000000e+00 : f32
      %94 = vector.broadcast %cst_51 : f32 to vector<2x128xf32>
      %c0_52 = arith.constant 0 : index
      %c0_53 = arith.constant 0 : index
      %95 = vector.load %arg6[%c0_52, %c0_53] : memref<2x128xf32, #tpu.memory_space<vmem>>, vector<2x128xf32>
      tpu.vector_store %arg6[%c0_52, %c0_53], %94 {strides = array<i32>} : memref<2x128xf32, #tpu.memory_space<vmem>>, vector<2x128xf32>,
    } else {
    }
    %c0 = arith.constant 0 : index
    %c0_2 = arith.constant 0 : index
    %c0_3 = arith.constant 0 : index
    %5 = vector.load %arg4[%c0, %c0_2, %c0_3] : memref<1x2x128xi32, #tpu.memory_space<vmem>>, vector<1x2x128xi32>
    %6 = vector.shape_cast %5 : vector<1x2x128xi32> to vector<2x128xi32>
    %7 = tpu.iota {dimensions = array<i32: 0>} : vector<2x128xi32>
    %8 = tpu.iota {dimensions = array<i32: 1>} : vector<2x128xi32>
    %c2_i32 = arith.constant 2 : i32
    %9 = arith.muli %arg1, %c2_i32 : i32
    %10 = vector.broadcast %9 : i32 to vector<2x128xi32>
    %11 = arith.addi %10, %7 : vector<2x128xi32>
    %c128_i32 = arith.constant 128 : i32
    %12 = vector.broadcast %c128_i32 : i32 to vector<2x128xi32>
    %13 = arith.muli %11, %12 : vector<2x128xi32>
    %14 = arith.addi %13, %8 : vector<2x128xi32>
    %c256_i32 = arith.constant 256 : i32
    %15 = vector.broadcast %c256_i32 : i32 to vector<2x128xi32>
    %16 = arith.cmpi slt, %14, %15 : vector<2x128xi32>
    %c0_4 = arith.constant 0 : index
    %c0_5 = arith.constant 0 : index
    %c0_6 = arith.constant 0 : index
    %c0_7 = arith.constant 0 : index
    %17 = vector.load %arg3[%c0_4, %c0_5, %c0_6, %c0_7] : memref<1x4x2x128xf32, #tpu.memory_space<vmem>>, vector<1x1x2x128xf32>
    %18 = vector.shape_cast %17 : vector<1x1x2x128xf32> to vector<2x128xf32>
    %c0_8 = arith.constant 0 : index
    %c1 = arith.constant 1 : index
    %c0_9 = arith.constant 0 : index
    %c0_10 = arith.constant 0 : index
    %19 = vector.load %arg3[%c0_8, %c1, %c0_9, %c0_10] : memref<1x4x2x128xf32, #tpu.memory_space<vmem>>, vector<1x1x2x128xf32>
    %20 = vector.shape_cast %19 : vector<1x1x2x128xf32> to vector<2x128xf32>
    %21 = arith.maximumf %18, %20 : vector<2x128xf32>
    %c0_11 = arith.constant 0 : index
    %c2 = arith.constant 2 : index
    %c0_12 = arith.constant 0 : index
    %c0_13 = arith.constant 0 : index
    %22 = vector.load %arg3[%c0_11, %c2, %c0_12, %c0_13] : memref<1x4x2x128xf32, #tpu.memory_space<vmem>>, vector<1x1x2x128xf32>
    %23 = vector.shape_cast %22 : vector<1x1x2x128xf32> to vector<2x128xf32>
    %24 = arith.maximumf %21, %23 : vector<2x128xf32>
    %c0_14 = arith.constant 0 : index
    %c3 = arith.constant 3 : index
    %c0_15 = arith.constant 0 : index
    %c0_16 = arith.constant 0 : index
    %25 = vector.load %arg3[%c0_14, %c3, %c0_15, %c0_16] : memref<1x4x2x128xf32, #tpu.memory_space<vmem>>, vector<1x1x2x128xf32>
    %26 = vector.shape_cast %25 : vector<1x1x2x128xf32> to vector<2x128xf32>
    %27 = arith.maximumf %24, %26 : vector<2x128xf32>
    %cst = arith.constant 0.000000e+00 : f32
    %28 = vector.broadcast %cst : f32 to vector<2x128xf32>
    %cst_17 = arith.constant 0.000000e+00 : f32
    %29 = vector.broadcast %cst_17 : f32 to vector<2x128xf32>
    %cst_18 = arith.constant 0.000000e+00 : f32
    %30 = vector.broadcast %cst_18 : f32 to vector<2x128xf32>
    %c0_19 = arith.constant 0 : index
    %c0_20 = arith.constant 0 : index
    %c0_21 = arith.constant 0 : index
    %c0_22 = arith.constant 0 : index
    %31 = vector.load %arg3[%c0_19, %c0_20, %c0_21, %c0_22] : memref<1x4x2x128xf32, #tpu.memory_space<vmem>>, vector<1x1x2x128xf32>
    %32 = vector.shape_cast %31 : vector<1x1x2x128xf32> to vector<2x128xf32>
    %33 = arith.subf %32, %27 : vector<2x128xf32>
    %34 = math.exp %33 : vector<2x128xf32>
    %35 = arith.addf %28, %34 : vector<2x128xf32>
    %c0_i32_23 = arith.constant 0 : i32
    %36 = vector.broadcast %c0_i32_23 : i32 to vector<2x128xi32>
    %37 = arith.cmpi eq, %6, %36 : vector<2x128xi32>
    %38 = arith.select %37, %34, %29 : vector<2x128xi1>, vector<2x128xf32>
    %c0_24 = arith.constant 0 : index
    %39 = memref.load %arg2[%c0_24] : memref<4xf32, #tpu.memory_space<smem>>
    %40 = vector.broadcast %39 : f32 to vector<2x128xf32>
    %41 = arith.select %37, %40, %30 : vector<2x128xi1>, vector<2x128xf32>
    %c0_25 = arith.constant 0 : index
    %c1_26 = arith.constant 1 : index
    %c0_27 = arith.constant 0 : index
    %c0_28 = arith.constant 0 : index
    %42 = vector.load %arg3[%c0_25, %c1_26, %c0_27, %c0_28] : memref<1x4x2x128xf32, #tpu.memory_space<vmem>>, vector<1x1x2x128xf32>
    %43 = vector.shape_cast %42 : vector<1x1x2x128xf32> to vector<2x128xf32>
    %44 = arith.subf %43, %27 : vector<2x128xf32>
    %45 = math.exp %44 : vector<2x128xf32>
    %46 = arith.addf %35, %45 : vector<2x128xf32>
    %c1_i32 = arith.constant 1 : i32
    %47 = vector.broadcast %c1_i32 : i32 to vector<2x128xi32>
    %48 = arith.cmpi eq, %6, %47 : vector<2x128xi32>
    %49 = arith.select %48, %45, %38 : vector<2x128xi1>, vector<2x128xf32>
    %c1_29 = arith.constant 1 : index
    %50 = memref.load %arg2[%c1_29] : memref<4xf32, #tpu.memory_space<smem>>
    %51 = vector.broadcast %50 : f32 to vector<2x128xf32>
    %52 = arith.select %48, %51, %41 : vector<2x128xi1>, vector<2x128xf32>
    %c0_30 = arith.constant 0 : index
    %c2_31 = arith.constant 2 : index
    %c0_32 = arith.constant 0 : index
    %c0_33 = arith.constant 0 : index
    %53 = vector.load %arg3[%c0_30, %c2_31, %c0_32, %c0_33] : memref<1x4x2x128xf32, #tpu.memory_space<vmem>>, vector<1x1x2x128xf32>
    %54 = vector.shape_cast %53 : vector<1x1x2x128xf32> to vector<2x128xf32>
    %55 = arith.subf %54, %27 : vector<2x128xf32>
    %56 = math.exp %55 : vector<2x128xf32>
    %57 = arith.addf %46, %56 : vector<2x128xf32>
    %c2_i32_34 = arith.constant 2 : i32
    %58 = vector.broadcast %c2_i32_34 : i32 to vector<2x128xi32>
    %59 = arith.cmpi eq, %6, %58 : vector<2x128xi32>
    %60 = arith.select %59, %56, %49 : vector<2x128xi1>, vector<2x128xf32>
    %c2_35 = arith.constant 2 : index
    %61 = memref.load %arg2[%c2_35] : memref<4xf32, #tpu.memory_space<smem>>
    %62 = vector.broadcast %61 : f32 to vector<2x128xf32>
    %63 = arith.select %59, %62, %52 : vector<2x128xi1>, vector<2x128xf32>
    %c0_36 = arith.constant 0 : index
    %c3_37 = arith.constant 3 : index
    %c0_38 = arith.constant 0 : index
    %c0_39 = arith.constant 0 : index
    %64 = vector.load %arg3[%c0_36, %c3_37, %c0_38, %c0_39] : memref<1x4x2x128xf32, #tpu.memory_space<vmem>>, vector<1x1x2x128xf32>
    %65 = vector.shape_cast %64 : vector<1x1x2x128xf32> to vector<2x128xf32>
    %66 = arith.subf %65, %27 : vector<2x128xf32>
    %67 = math.exp %66 : vector<2x128xf32>
    %68 = arith.addf %57, %67 : vector<2x128xf32>
    %c3_i32 = arith.constant 3 : i32
    %69 = vector.broadcast %c3_i32 : i32 to vector<2x128xi32>
    %70 = arith.cmpi eq, %6, %69 : vector<2x128xi32>
    %71 = arith.select %70, %67, %60 : vector<2x128xi1>, vector<2x128xf32>
    %c3_40 = arith.constant 3 : index
    %72 = memref.load %arg2[%c3_40] : memref<4xf32, #tpu.memory_space<smem>>
    %73 = vector.broadcast %72 : f32 to vector<2x128xf32>
    %74 = arith.select %70, %73, %63 : vector<2x128xi1>, vector<2x128xf32>
    %75 = arith.divf %71, %68 : vector<2x128xf32>
    %cst_41 = arith.constant 9.99999974E-5 : f32
    %76 = vector.broadcast %cst_41 : f32 to vector<2x128xf32>
    %77 = arith.addf %75, %76 : vector<2x128xf32>
    %78 = math.log %77 : vector<2x128xf32>
    %cst_42 = arith.constant 1.000000e+00 : f32
    %79 = vector.broadcast %cst_42 : f32 to vector<2x128xf32>
    %80 = arith.subf %79, %77 : vector<2x128xf32>
    %81 = arith.mulf %80, %80 : vector<2x128xf32>
    %c0_43 = arith.constant 0 : index
    %c0_44 = arith.constant 0 : index
    %82 = vector.load %arg6[%c0_43, %c0_44] : memref<2x128xf32, #tpu.memory_space<vmem>>, vector<2x128xf32>
    %83 = arith.mulf %74, %81 : vector<2x128xf32>
    %84 = arith.mulf %83, %78 : vector<2x128xf32>
    %cst_45 = arith.constant 0.000000e+00 : f32
    %85 = vector.broadcast %cst_45 : f32 to vector<2x128xf32>
    %86 = arith.select %16, %84, %85 : vector<2x128xi1>, vector<2x128xf32>
    %87 = arith.addf %82, %86 : vector<2x128xf32>
    %c0_46 = arith.constant 0 : index
    %c0_47 = arith.constant 0 : index
    %88 = vector.load %arg6[%c0_46, %c0_47] : memref<2x128xf32, #tpu.memory_space<vmem>>, vector<2x128xf32>
    tpu.vector_store %arg6[%c0_46, %c0_47], %87 {strides = array<i32>} : memref<2x128xf32, #tpu.memory_space<vmem>>, vector<2x128xf32>,
    %c1_i32_48 = arith.constant 1 : i32
    %89 = arith.cmpi eq, %arg0, %c1_i32_48 : i32
    %c0_i32_49 = arith.constant 0 : i32
    %90 = arith.cmpi eq, %arg1, %c0_i32_49 : i32
    %91 = arith.andi %89, %90 : i1
    %92 = arith.extui %91 : i1 to i32
    %c0_i32_50 = arith.constant 0 : i32
    %93 = arith.cmpi ne, %92, %c0_i32_50 : i32
    scf.if %93 {
      %c0_51 = arith.constant 0 : index
      %c0_52 = arith.constant 0 : index
      %94 = vector.load %arg6[%c0_51, %c0_52] : memref<2x128xf32, #tpu.memory_space<vmem>>, vector<2x128xf32>
      %95 = vector.shape_cast %94 : vector<2x128xf32> to vector<1x2x128xf32>
      %cst_53 = arith.constant dense<0.000000e+00> : vector<1xf32>
      %96 = vector.multi_reduction <add>, %95, %cst_53 [1, 2] : vector<1x2x128xf32> to vector<1xf32>
      %97 = vector.shape_cast %96 : vector<1xf32> to vector<1x1x1xf32>
      %98 = vector.extract %97[0, 0, 0] : f32 from vector<1x1x1xf32>
      %cst_54 = arith.constant 0.000000e+00 : f32
      %99 = arith.subf %cst_54, %98 : f32
      %cst_55 = arith.constant 0.001953125 : f32
      %100 = arith.mulf %99, %cst_55 : f32
      %c0_56 = arith.constant 0 : index
      %c0_57 = arith.constant 0 : index
      %101 = memref.load %arg5[%c0_56, %c0_57] : memref<1x1xf32, #tpu.memory_space<smem>>
      memref.store %100, %arg5[%c0_56, %c0_57] : memref<1x1xf32, #tpu.memory_space<smem>>
    } else {
    }
    return
  }
  func.func @transform_0(%arg0: i32, %arg1: i32) -> i32 {
    %c0_i32 = arith.constant 0 : i32
    %c0_i32_0 = arith.constant 0 : i32
    return %c0_i32 : i32
  }
  func.func @transform_1(%arg0: i32, %arg1: i32) -> (i32, i32, i32, i32) {
    %c0_i32 = arith.constant 0 : i32
    %c0_i32_0 = arith.constant 0 : i32
    %c0_i32_1 = arith.constant 0 : i32
    return %arg0, %c0_i32, %arg1, %c0_i32_0 : i32, i32, i32, i32
  }
  func.func @transform_2(%arg0: i32, %arg1: i32) -> (i32, i32, i32) {
    %c0_i32 = arith.constant 0 : i32
    %c0_i32_0 = arith.constant 0 : i32
    return %arg0, %arg1, %c0_i32 : i32, i32, i32
  }
  func.func @transform_3(%arg0: i32, %arg1: i32) -> (i32, i32) {
    %c0_i32 = arith.constant 0 : i32
    %c0_i32_0 = arith.constant 0 : i32
    %c0_i32_1 = arith.constant 0 : i32
    return %c0_i32, %c0_i32_0 : i32, i32
  }
}

</mosaic_0001>

<llo_original>
// kernel: tpu_custom_call.1
$region0: #{tpu_custom_call.1}
  #allocation0 [shape = 'u32[]', space=smem, size = 0x4, offset = 0x4, fixed_abs, tag = 'smem constant byte address 0x4 - core index']
  #allocation1 [shape = 'u32[72,128]{1,0:T(1,128)}', space=vmem, size = 0x9000, scoped, tag = 'internal scratch']
  #allocation2 [shape = 'f32[2,128]{1,0:T(2,128)}', space=vmem, size = 0x400, scoped, tag = 'scratch operand']
  %s0 = inlined_call_operand.hbm [shape: f32[4], index: 0, kind: input, shape index: {}]
  %s1 = inlined_call_operand.hbm [shape: f32[2,4,2,128], index: 1, kind: input, shape index: {}]
  %s2 = inlined_call_operand.hbm [shape: s32[2,2,128], index: 2, kind: input, shape index: {}]
  %s3 = inlined_call_operand.hbm [shape: f32[1,1], index: 3, kind: output, shape index: {}]
  %s4 = sld [smem:[#allocation0]]
  $region65: #{tpu_custom_call.1} parent=0
    _
  %s6 = ssub.s32 1, %s4
  %s7 = scalar_select 0, %s6, %s4
  $region1: #{tpu_custom_call.1} parent=0
    #allocation3 [shape = 'u8[512]{0}', space=smem, size = 0x200, scoped, tag = 'input window, operand 0, single buffered']
    #allocation4 [shape = 's32[2]{0}', space=sflag, size = 0x8, scoped, tag = 'scoped memory for tpu_custom_call.1']
    #allocation5 [shape = 's32[2]{0}', space=sflag, size = 0x8, scoped, tag = 'scoped memory for tpu_custom_call.1']
    #allocation6 [shape = 's32[2]{0}', space=sflag, size = 0x8, scoped, tag = 'scoped memory for tpu_custom_call.1']
    #allocation7 [shape = 'u8[8192]{0}', space=vmem, size = 0x2000, scoped, tag = 'input window, operand 1']
    #allocation8 [shape = 'u8[2048]{0}', space=vmem, size = 0x800, scoped, tag = 'input window, operand 2']
    #allocation9 [shape = 's32[2]{0}', space=sflag, size = 0x8, scoped, tag = 'scoped memory for tpu_custom_call.1']
    #allocation10 [shape = 'u8[512]{0}', space=smem, size = 0x200, scoped, tag = 'output window, operand 0, single buffered']
    %8 = vsyncpa [#allocation5], 0
    %9 = vsyncpa [#allocation4], 0
    %s10 = scalar_lea.sflag [#allocation4], 1
    %11 = vsyncpa %s10, 0
    %12 = vsyncpa [#allocation9], 0
    %s13 = scalar_lea.sflag [#allocation9], 1
    %14 = vsyncpa %s13, 0
    %15 = vsyncpa [#allocation6], 0
    loop: start=0, step=1, limit=4
    $region2: #{tpu_custom_call.1} parent=1 // loop_pre_header
      _
    $region3: #{tpu_custom_call.1} parent=1 // loop_header
      %s17 = sphi 0, %s21
      %p18 = scmp.ge.s32.totalorder %s17, 4
      %s24 = sphi 0, %s36
      %s25 = sphi 0, %s32
      %s26 = sphi 0, %s24
      %s27 = sphi 0, %s25
      %s28 = sphi 0, %s26
      %s29 = sphi 0, %s27
      %s37 = sphi 0, %s37
      %s39 = sphi 0, %s37
      %s40 = sphi 0, %s39
      %s54 = sphi 0, %s40
      %s62 = sphi 0, %s64
      %s65 = sphi 0, %s62
      %s66 = sphi 0, %s65
      %s82 = sphi 0, %s66
      %s90 = sphi 0, %s92
      %s93 = sphi 0, %s90
      %s94 = sphi 0, %s93
      %s110 = sphi 0, %s94
      %s114 = sphi 0, %s114
      %s116 = sphi 0, %s114
      %s117 = sphi 0, %s116
      %s131 = sphi 0, %s117
    $region4: #{tpu_custom_call.1} parent=1 // loop_header_branch
      %20 = sbr.rel (%p18) target = $region8
    $region5: #{tpu_custom_call.1} parent=1 // loop_body
      %s22 = ssub.s32 %s17, 1
      %s23 = ssub.s32 %s17, 2
      %s30 = sadd.s32 1, %s25
      %p31 = scmp.ge.s32.totalorder %s30, 1
      %s32 = scalar_select %p31, 0, %s30
      %s33 = sadd.s32 1, %s24
      %s34 = scalar_select %p31, %s33, %s24
      %p35 = scmp.ge.s32.totalorder %s34, 2
      %s36 = scalar_select %p35, 0, %s34
      %s38 = sadd.s32 %s37, 1
      %p41 = scmp.eq.s32.totalorder %s17, 1
      %p42 = scmp.ne.s32.totalorder %s37, %s39
      %p43 = scmp.eq.s32.totalorder %s17, 0
      %p44 = por %p42, %p43
      %p45 = scmp.ne.s32.totalorder %s37, %s39
      %p46 = scmp.eq.s32.totalorder %s22, 1
      %p47 = por %p45, %p46
      %p48 = scmp.ne.s32.totalorder %s39, %s40
      %p49 = scmp.eq.s32.totalorder %s22, 0
      %p50 = por %p48, %p49
      %p51 = scmp.ne.s32.totalorder %s39, %s40
      %p52 = scmp.eq.s32.totalorder %s23, 1
      %p53 = por %p51, %p52
      %p55 = scmp.ne.s32.totalorder %s40, %s54
      %p56 = scmp.eq.s32.totalorder %s23, 0
      %p57 = por %p55, %p56
      %s58 = ssub.s32 %s24, %s36
      %s59 = ssub.s32 %s25, %s32
      %s60 = sor.u32 %s58, %s59
      %p61 = scmp.eq.s32.totalorder %s60, 0
      %s63 = sadd.s32 %s62, 1
      %s64 = scalar_select %p61, %s62, %s63
      %p67 = pneg %p61
      %p68 = scmp.eq.s32.totalorder %s17, 1
      %p69 = por %p67, %p68
      %p70 = scmp.ne.s32.totalorder %s62, %s65
      %p71 = scmp.eq.s32.totalorder %s17, 0
      %p72 = por %p70, %p71
      %p73 = scmp.ne.s32.totalorder %s62, %s65
      %p74 = scmp.eq.s32.totalorder %s22, 1
      %p75 = por %p73, %p74
      %p76 = scmp.ne.s32.totalorder %s65, %s66
      %p77 = scmp.eq.s32.totalorder %s22, 0
      %p78 = por %p76, %p77
      %p79 = scmp.ne.s32.totalorder %s65, %s66
      %p80 = scmp.eq.s32.totalorder %s23, 1
      %p81 = por %p79, %p80
      %p83 = scmp.ne.s32.totalorder %s66, %s82
      %p84 = scmp.eq.s32.totalorder %s23, 0
      %p85 = por %p83, %p84
      %s86 = ssub.s32 %s24, %s36
      %s87 = ssub.s32 %s25, %s32
      %s88 = sor.u32 %s86, %s87
      %p89 = scmp.eq.s32.totalorder %s88, 0
      %s91 = sadd.s32 %s90, 1
      %s92 = scalar_select %p89, %s90, %s91
      %p95 = pneg %p89
      %p96 = scmp.eq.s32.totalorder %s17, 1
      %p97 = por %p95, %p96
      %p98 = scmp.ne.s32.totalorder %s90, %s93
      %p99 = scmp.eq.s32.totalorder %s17, 0
      %p100 = por %p98, %p99
      %p101 = scmp.ne.s32.totalorder %s90, %s93
      %p102 = scmp.eq.s32.totalorder %s22, 1
      %p103 = por %p101, %p102
      %p104 = scmp.ne.s32.totalorder %s93, %s94
      %p105 = scmp.eq.s32.totalorder %s22, 0
      %p106 = por %p104, %p105
      %p107 = scmp.ne.s32.totalorder %s93, %s94
      %p108 = scmp.eq.s32.totalorder %s23, 1
      %p109 = por %p107, %p108
      %p111 = scmp.ne.s32.totalorder %s94, %s110
      %p112 = scmp.eq.s32.totalorder %s23, 0
      %p113 = por %p111, %p112
      %s115 = sadd.s32 %s114, 1
      %p118 = scmp.eq.s32.totalorder %s17, 1
      %p119 = scmp.ne.s32.totalorder %s114, %s116
      %p120 = scmp.eq.s32.totalorder %s17, 0
      %p121 = por %p119, %p120
      %p122 = scmp.ne.s32.totalorder %s114, %s116
      %p123 = scmp.eq.s32.totalorder %s22, 1
      %p124 = por %p122, %p123
      %p125 = scmp.ne.s32.totalorder %s116, %s117
      %p126 = scmp.eq.s32.totalorder %s22, 0
      %p127 = por %p125, %p126
      %p128 = scmp.ne.s32.totalorder %s116, %s117
      %p129 = scmp.eq.s32.totalorder %s23, 1
      %p130 = por %p128, %p129
      %p132 = scmp.ne.s32.totalorder %s117, %s131
      %p133 = scmp.eq.s32.totalorder %s23, 0
      %p134 = por %p132, %p133
      %p135 = scmp.le.s32.totalorder 1, %s17
      %p136 = scmp.lt.s32.totalorder %s17, 3
      %p137 = pnand %p135, %p136
      %p138 = pneg %p137
      // Predicated region
      $region9: #{tpu_custom_call.1} parent=5 // pred_check
        _
      $region10: #{tpu_custom_call.1} parent=5 // pred_check_branch
        %140 = sbr.rel (%p137) target = $region12
      $region11: #{tpu_custom_call.1} parent=5 // pred_region
        %s141 = ssub.s32 %s17, 1
        // Predicated region
        $region13: #{tpu_custom_call.1} parent=11 // pred_check
          %p142 = pneg %p50
        $region14: #{tpu_custom_call.1} parent=11 // pred_check_branch
          %144 = sbr.rel (%p142) target = $region16
        $region15: #{tpu_custom_call.1} parent=11 // pred_region
          %146 = vsyncadd [#allocation5], 0
          %s148 = sshll.u32 %s0, 4
          %s149 = int_to_ptr.hbm [resolvable:$true] %s148
          %151 = dma.hbm_to_smem %s149, 16, [#allocation3], [#allocation5]
        $region16: #{tpu_custom_call.1} parent=11 // pred_fallthru
          _
      $region12: #{tpu_custom_call.1} parent=5 // pred_fallthru
        _
      %p152 = scmp.lt.s32.totalorder %s17, 2
      // Predicated region
      $region17: #{tpu_custom_call.1} parent=5 // pred_check
        %p153 = pneg %p152
      $region18: #{tpu_custom_call.1} parent=5 // pred_check_branch
        %155 = sbr.rel (%p153) target = $region20
      $region19: #{tpu_custom_call.1} parent=5 // pred_region
        // Predicated region
        $region21: #{tpu_custom_call.1} parent=19 // pred_check
          %p156 = pneg %p72
        $region22: #{tpu_custom_call.1} parent=19 // pred_check_branch
          %158 = sbr.rel (%p156) target = $region24
        $region23: #{tpu_custom_call.1} parent=19 // pred_region
          %s159 = sand.u32 %s62, 1
          %s160 = scalar_lea.sflag [#allocation4], %s159
          %s161 = sand.u32 %s62, 1
          %s162 = smul.addr %s161, 8
          %s163 = scalar_lea.vmem [#allocation7], %s162
          %165 = vsyncadd %s160, 0
          %s166 = smul.addr %s24, 4
          %s167 = sadd.s32 %s25, %s166
          %s168 = smul.addr %s167, 2
          %s169 = scalar_lea.hbm %s1, %s168
          %s170 = sshll.u32 %s169, 4
          %s171 = int_to_ptr.hbm [resolvable:$true] %s170
          %s172 = sshll.u32 %s163, 4
          %s173 = int_to_ptr.vmem [resolvable:$true] %s172
          %178 = dma.hbm_to_vmem [thread:$0]  %s171, 128, %s173, %s160, 32, 32, 2
        $region24: #{tpu_custom_call.1} parent=19 // pred_fallthru
          _
        // Predicated region
        $region25: #{tpu_custom_call.1} parent=19 // pred_check
          %p179 = pneg %p100
        $region26: #{tpu_custom_call.1} parent=19 // pred_check_branch
          %181 = sbr.rel (%p179) target = $region28
        $region27: #{tpu_custom_call.1} parent=19 // pred_region
          %s182 = sand.u32 %s90, 1
          %s183 = scalar_lea.sflag [#allocation9], %s182
          %s184 = sand.u32 %s90, 1
          %s185 = smul.addr %s184, 2
          %s186 = scalar_lea.vmem [#allocation8], %s185
          %188 = vsyncadd %s183, 0
          %s189 = sadd.s32 %s25, %s24
          %s190 = smul.addr %s189, 2
          %s191 = scalar_lea.hbm %s2, %s190
          %s193 = sshll.u32 %s191, 4
          %s194 = int_to_ptr.hbm [resolvable:$true] %s193
          %s195 = sshll.u32 %s186, 4
          %s196 = int_to_ptr.vmem [resolvable:$true] %s195
          %198 = dma.hbm_to_vmem [thread:$0]  %s194, 32, %s196, %s183
        $region28: #{tpu_custom_call.1} parent=19 // pred_fallthru
          _
      $region20: #{tpu_custom_call.1} parent=5 // pred_fallthru
        _
      %p199 = scmp.le.s32.totalorder 1, %s17
      %p200 = scmp.lt.s32.totalorder %s17, 3
      %p201 = pnand %p199, %p200
      %p202 = pneg %p201
      // Predicated region
      $region29: #{tpu_custom_call.1} parent=5 // pred_check
        _
      $region30: #{tpu_custom_call.1} parent=5 // pred_check_branch
        %204 = sbr.rel (%p201) target = $region32
      $region31: #{tpu_custom_call.1} parent=5 // pred_region
        %s205 = ssub.s32 %s17, 1
        // Predicated region
        $region33: #{tpu_custom_call.1} parent=31 // pred_check
          %p206 = pneg %p50
        $region34: #{tpu_custom_call.1} parent=31 // pred_check_branch
          %208 = sbr.rel (%p206) target = $region36
        $region35: #{tpu_custom_call.1} parent=31 // pred_region
          %210 = dma.done [#allocation5], 16
        $region36: #{tpu_custom_call.1} parent=31 // pred_fallthru
          _
        %s211 = sand.u32 %s65, 1
        %s212 = scalar_lea.sflag [#allocation4], %s211
        %s213 = sand.u32 %s65, 1
        %s214 = smul.addr %s213, 8
        %s215 = scalar_lea.vmem [#allocation7], %s214
        // Predicated region
        $region37: #{tpu_custom_call.1} parent=31 // pred_check
          %p216 = pneg %p78
        $region38: #{tpu_custom_call.1} parent=31 // pred_check_branch
          %218 = sbr.rel (%p216) target = $region40
        $region39: #{tpu_custom_call.1} parent=31 // pred_region
          %220 = dma.done %s212, 128
        $region40: #{tpu_custom_call.1} parent=31 // pred_fallthru
          _
        %s221 = sand.u32 %s93, 1
        %s222 = scalar_lea.sflag [#allocation9], %s221
        %s223 = sand.u32 %s93, 1
        %s224 = smul.addr %s223, 2
        %s225 = scalar_lea.vmem [#allocation8], %s224
        // Predicated region
        $region41: #{tpu_custom_call.1} parent=31 // pred_check
          %p226 = pneg %p106
        $region42: #{tpu_custom_call.1} parent=31 // pred_check_branch
          %228 = sbr.rel (%p226) target = $region44
        $region43: #{tpu_custom_call.1} parent=31 // pred_region
          %230 = dma.done %s222, 32
        $region44: #{tpu_custom_call.1} parent=31 // pred_fallthru
          _
        %231 = sfence
        %p232 = pneg %p50
        %p233 = pneg %p47
        %s234 = sand.u32 %s65, 1
        %s235 = scalar_lea.sflag [#allocation4], %s234
        %s236 = sand.u32 %s65, 1
        %s237 = smul.addr %s236, 8
        %s238 = scalar_lea.vmem [#allocation7], %s237
        %p239 = pneg %p78
        %p240 = pneg %p75
        %s241 = sand.u32 %s93, 1
        %s242 = scalar_lea.sflag [#allocation9], %s241
        %s243 = sand.u32 %s93, 1
        %s244 = smul.addr %s243, 2
        %s245 = scalar_lea.vmem [#allocation8], %s244
        %p246 = pneg %p106
        %p247 = pneg %p103
        %p248 = pneg %p127
        %p249 = pneg %p124
        %p250 = scmp.eq.s32.totalorder %s26, 0
        %p251 = scmp.eq.s32.totalorder %s27, 0
        %p252 = pnand %p250, %p251
        %p253 = pneg %p252
        // Predicated region
        $region45: #{tpu_custom_call.1} parent=31 // pred_check
          _
        $region46: #{tpu_custom_call.1} parent=31 // pred_check_branch
          %255 = sbr.rel (%p252) target = $region48
        $region47: #{tpu_custom_call.1} parent=31 // pred_region
          %256 = vst [vmem:[#allocation2] sm:$0x3] 0.0
        $region48: #{tpu_custom_call.1} parent=31 // pred_fallthru
          _
        %v257 = vld [vmem:[%s225] sm:$0x3]
        %v258 = vlaneseq
        %v259 = vshrl.u32 %v258, 7
        %v260 = vlaneseq
        %v261 = vand.u32 %v260, 127
        %s262 = smul.u32 %s27, 2
        %v263 = vstv %s262
        %v264 = vadd.s32 %v263, %v259
        %v265 = vmul.u32 %v264, 128
        %v266 = vadd.s32 %v265, %v261
        %vm267 = vcmp.lt.s32.totalorder %v266, 256
        %v268 = vld [vmem:[%s215] sm:$0x3]
        %s269 = scalar_lea.vmem %s215, 2 [#allocation7]
        %v270 = vld [vmem:[%s269] sm:$0x3]
        %v271 = vmax.f32 %v268, %v270
        %s272 = scalar_lea.vmem %s215, 4 [#allocation7]
        %v273 = vld [vmem:[%s272] sm:$0x3]
        %v274 = vmax.f32 %v271, %v273
        %s275 = scalar_lea.vmem %s215, 6 [#allocation7]
        %v276 = vld [vmem:[%s275] sm:$0x3]
        %v277 = vmax.f32 %v274, %v276
        %v278 = vsub.f32 %v268, %v277
        %v279 = vmul.f32 %v278, 1.442695
        %v280 = vpow.pop %v279
        %v281 = vadd.f32 %v280, 0.0
        %vm282 = vcmp.eq.s32.totalorder %v257, 0
        %v283 = vsel %vm282, %v280, 0.0
        %s284 = sld [smem:[#allocation3]]
        %v285 = vstv %s284
        %v286 = vsel %vm282, %v285, 0.0
        %v287 = vsub.f32 %v270, %v277
        %v288 = vmul.f32 %v287, 1.442695
        %v289 = vpow.pop %v288
        %v290 = vadd.f32 %v281, %v289
        %vm291 = vcmp.eq.s32.totalorder %v257, 1
        %v292 = vsel %vm291, %v289, %v283
        %s293 = sld [smem:[#allocation3 + $0x1]]
        %v294 = vstv %s293
        %v295 = vsel %vm291, %v294, %v286
        %v296 = vsub.f32 %v273, %v277
        %v297 = vmul.f32 %v296, 1.442695
        %v298 = vpow.pop %v297
        %v299 = vadd.f32 %v290, %v298
        %vm300 = vcmp.eq.s32.totalorder %v257, 2
        %v301 = vsel %vm300, %v298, %v292
        %s302 = sld [smem:[#allocation3 + $0x2]]
        %v303 = vstv %s302
        %v304 = vsel %vm300, %v303, %v295
        %v305 = vsub.f32 %v276, %v277
        %v306 = vmul.f32 %v305, 1.442695
        %v307 = vpow.pop %v306
        %v308 = vadd.f32 %v299, %v307
        %vm309 = vcmp.eq.s32.totalorder %v257, 3
        %v310 = vsel %vm309, %v307, %v301
        %s311 = sld [smem:[#allocation3 + $0x3]]
        %v312 = vstv %s311
        %v313 = vsel %vm309, %v312, %v304
        %v314 = vrcp.pop %v308
        %v315 = vmul.f32 %v308, %v314
        %v316 = vsub.f32 1.0, %v315
        %v317 = vmul.f32 %v314, %v316
        %v318 = vadd.f32 %v314, %v317
        %vm319 = vweird.f32 %v308
        %vm320 = vweird.f32 %v314
        %vm321 = vmor %vm319, %vm320
        %v322 = vsel %vm321, %v314, %v318
        %v323 = vand.u32 2147483647, %v308
        %vm324 = vcmp.eq.f32.partialorder %v323, 8.507059e+37
        %v325 = vand.u32 %v308, 2147483648
        %v326 = vor.u32 1.1754944e-38, %v325
        %v327 = vsel %vm324, %v326, %v322
        %v328 = vmul.f32 %v310, %v327
        %v329 = vadd.f32 %v328, 0.0001
        %v330 = vlog2.pop %v329
        %v331 = vmul.f32 %v330, 0.6931472
        %v332 = vsub.f32 1.0, %v329
        %v333 = vmul.f32 %v332, %v332
        %v334 = vld [vmem:[#allocation2] sm:$0x3]
        %v335 = vmul.f32 %v313, %v333
        %v336 = vmul.f32 %v335, %v331
        %v337 = vsel %vm267, %v336, 0.0
        %v338 = vadd.f32 %v334, %v337
        %339 = vst [vmem:[#allocation2] sm:$0x3] %v338
        %p340 = scmp.eq.s32.totalorder %s26, 1
        %p341 = pnand %p340, %p251
        %p342 = pneg %p341
        // Predicated region
        $region49: #{tpu_custom_call.1} parent=31 // pred_check
          _
        $region50: #{tpu_custom_call.1} parent=31 // pred_check_branch
          %344 = sbr.rel (%p341) target = $region52
        $region51: #{tpu_custom_call.1} parent=31 // pred_region
          %v345 = vld [vmem:[#allocation2] sm:$0x3]
          %vm346 = vcmask 1041408
          %v347 = vsel %vm346, %v345, 0.0
          %348 = vadd.xlane.f32.xlu0 %v347
          %v349 = vpop.xlane.xlu0 %348
          %v350 = vrot.slane %v349, 4
          %v351 = vadd.f32 %v349, %v350
          %v352 = vrot.slane %v351, 2
          %v353 = vadd.f32 %v351, %v352
          %v354 = vrot.slane %v353, 1
          %v355 = vadd.f32 %v353, %v354
          %s356 = vtos %v355
          %s357 = ssub.f32 0.0, %s356
          %s358 = smul.f32 %s357, 0.001953125
          %s359 = scalar_lea.smem [#allocation10], 0
          %360 = sst [smem:[%s359]] %s358
        $region52: #{tpu_custom_call.1} parent=31 // pred_fallthru
          _
        // Predicated region
        $region53: #{tpu_custom_call.1} parent=31 // pred_check
          %p361 = pneg %p124
        $region54: #{tpu_custom_call.1} parent=31 // pred_check_branch
          %363 = sbr.rel (%p361) target = $region56
        $region55: #{tpu_custom_call.1} parent=31 // pred_region
          %365 = vsyncadd [#allocation6], 0
          %s367 = sshll.u32 %s3, 4
          %s368 = int_to_ptr.hbm [resolvable:$true] %s367
          %370 = dma.smem_to_hbm [#allocation10], 16, %s368, [#allocation6]
        $region56: #{tpu_custom_call.1} parent=31 // pred_fallthru
          _
        // Predicated region
        $region57: #{tpu_custom_call.1} parent=31 // pred_check
          %p371 = pneg %p124
        $region58: #{tpu_custom_call.1} parent=31 // pred_check_branch
          %373 = sbr.rel (%p371) target = $region60
        $region59: #{tpu_custom_call.1} parent=31 // pred_region
          %375 = dma.done [#allocation6], 16
        $region60: #{tpu_custom_call.1} parent=31 // pred_fallthru
          _
        %376 = sfence
      $region32: #{tpu_custom_call.1} parent=5 // pred_fallthru
        _
      %p377 = scmp.le.s32.totalorder 2, %s17
      // Predicated region
      $region61: #{tpu_custom_call.1} parent=5 // pred_check
        %p378 = pneg %p377
      $region62: #{tpu_custom_call.1} parent=5 // pred_check_branch
        %380 = sbr.rel (%p378) target = $region64
      $region63: #{tpu_custom_call.1} parent=5 // pred_region
        %s381 = ssub.s32 %s17, 2
      $region64: #{tpu_custom_call.1} parent=5 // pred_fallthru
        _
    $region6: #{tpu_custom_call.1} parent=1 // loop_footer
      %s21 = sadd.s32 1, %s17
    $region7: #{tpu_custom_call.1} parent=1 // loop_footer_branch
      %16 = sbr.rel target = $region3
    $region8: #{tpu_custom_call.1} parent=1 // loop_exit
      _
    %382 = vsyncpa [#allocation4], 1
    %s383 = scalar_lea.sflag [#allocation4], 1
    %384 = vsyncpa %s383, 1
    %385 = vsyncpa [#allocation9], 1
    %s386 = scalar_lea.sflag [#allocation9], 1
    %387 = vsyncpa %s386, 1
    %388 = vsyncpa [#allocation5], 1
    %s389 = scalar_lea.sflag [#allocation5], 1
    %390 = vsyncpa %s389, 1
    %391 = vsyncpa [#allocation6], 1
    %s392 = scalar_lea.sflag [#allocation6], 1
    %393 = vsyncpa %s392, 1

</llo_original>
